<compile_context>
chip_gen: v7x
topology: tpu7x:2x2x1
jax: 0.10.0
libtpu: 0.0.40
codegen_flags: <defaults>
</compile_context>

<pallas_src>
import jax
import jax.numpy as jnp
from jax.experimental import pallas as pl
from jax.experimental.pallas import tpu as pltpu


def _cond_entropy_kernel(x_ref, o_ref):
    """x_ref: (TB, C) logits tile.  o_ref: (TB, 1) per-row sum_c p*logp."""
    x = x_ref[...].astype(jnp.float32)                  # (TB, C)
    m = jnp.max(x, axis=-1, keepdims=True)              # XLU lane reduce
    s = x - m                                           # VPU
    e = jnp.exp(s)                                      # EUP
    z = jnp.sum(e, axis=-1, keepdims=True)              # XLU lane reduce
    es = jnp.sum(e * s, axis=-1, keepdims=True)         # VPU mul + XLU reduce
    inv_z = pl.reciprocal(z, approx=False)
    # sum_c p * logp  ==  (sum_c e*s) / z - log(z)
    o_ref[...] = es * inv_z - jnp.log(z)                # (TB, 1)


def _pick_tb(B, C, itemsize, *, vmem_budget_bytes=8 << 20, max_rows=1024):
    """Largest batch-tile that (a) divides B, (b) is a sublane multiple of 8
    (or == B), and (c) keeps the double-buffered input tile under budget."""
    cap = max(8, vmem_budget_bytes // (2 * C * max(int(itemsize), 1)))
    cap = min(cap, max_rows, B)
    for tb in range(cap, 0, -1):
        if B % tb == 0 and (tb == B or tb % 8 == 0):
            return tb
    # Ragged / awkward B: fall back to a single tile.
    # TODO(synk): mask tail rows with pl.cdiv grid for ragged batch support.
    return B


def conditional_entropy_loss(x, *, tb=None):
    """x: (B, C) float logits (f32 or bf16).  Returns scalar f32."""
    B, C = x.shape
    if tb is None:
        tb = _pick_tb(B, C, jnp.dtype(x.dtype).itemsize)
    assert B % tb == 0 and (tb == B or tb % 8 == 0)
    num_tiles = B // tb

    row_ent = pl.pallas_call(
        _cond_entropy_kernel,
        out_shape=jax.ShapeDtypeStruct((B, 1), jnp.float32),
        grid_spec=pltpu.PrefetchScalarGridSpec(
            num_scalar_prefetch=0,
            grid=(num_tiles,),
            in_specs=[pl.BlockSpec((tb, C), lambda i: (i, 0))],
            out_specs=pl.BlockSpec((tb, 1), lambda i: (i, 0)),
        ),
        compiler_params=pltpu.CompilerParams(
            dimension_semantics=("parallel",)),
    )(x)

    # -1.0 * mean over batch (tiny reduce over B floats; stays in plain JAX).
    return (-jnp.sum(row_ent) / jnp.float32(B)).astype(jnp.float32)


def _reference(x):
    xf = x.astype(jnp.float32)
    logp = jax.nn.log_softmax(xf, axis=1)
    p = jax.nn.softmax(xf, axis=1)
    b = jnp.sum(p * logp, axis=1)
    return -1.0 * jnp.mean(b, axis=0)


if __name__ == "__main__":
    key = jax.random.PRNGKey(0)
    B, C = 8, 16  # small demo: batch of 8, 16 classes of logits
    x = jax.random.normal(key, (B, C), dtype=jnp.float32)

    out = conditional_entropy_loss(x)
    out = jax.block_until_ready(out)

    ref = _reference(x)
    assert jnp.allclose(out, ref, atol=1e-5, rtol=1e-5), (out, ref)

    # Also exercise a multi-tile grid to cover the tiled / parallel path.
    B2, C2 = 256, 128
    x2 = jax.random.normal(jax.random.PRNGKey(1), (B2, C2), dtype=jnp.float32)
    out2 = jax.block_until_ready(conditional_entropy_loss(x2, tb=64))
    ref2 = _reference(x2)
    assert jnp.allclose(out2, ref2, atol=1e-5, rtol=1e-5), (out2, ref2)

    print("KERNEL_OK")
</pallas_src>

<mosaic_0001>
module attributes {stable_mosaic.version = 11 : i64} {
  func.func @_cond_entropy_kernel(%arg0: i32, %arg1: memref<8x16xf32, #tpu.memory_space<vmem>>, %arg2: memref<8x1xf32, #tpu.memory_space<vmem>>) attributes {dimension_semantics = [#tpu.dimension_semantics<parallel>], iteration_bounds = array<i64: 1>, scalar_prefetch = 0 : i64, scratch_operands = 0 : i64, tpu.core_type = #tpu.core_type<tc>, window_params = [{transform_indices = @transform_0, window_bounds = array<i64: 8, 16>}, {transform_indices = @transform_1, window_bounds = array<i64: 8, 1>}]} {
    %c0 = arith.constant 0 : index
    %c0_0 = arith.constant 0 : index
    %0 = vector.load %arg1[%c0, %c0_0] : memref<8x16xf32, #tpu.memory_space<vmem>>, vector<8x16xf32>
    %cst = arith.constant dense<0xFF800000> : vector<8xf32>
    %1 = vector.multi_reduction <maximumf>, %0, %cst [1] : vector<8x16xf32> to vector<8xf32>
    %2 = vector.shape_cast %1 : vector<8xf32> to vector<8x1xf32>
    %3 = vector.broadcast %2 : vector<8x1xf32> to vector<8x16xf32>
    %4 = arith.subf %0, %3 : vector<8x16xf32>
    %5 = math.exp %4 : vector<8x16xf32>
    %cst_1 = arith.constant dense<0.000000e+00> : vector<8xf32>
    %6 = vector.multi_reduction <add>, %5, %cst_1 [1] : vector<8x16xf32> to vector<8xf32>
    %7 = vector.shape_cast %6 : vector<8xf32> to vector<8x1xf32>
    %8 = arith.mulf %5, %4 : vector<8x16xf32>
    %cst_2 = arith.constant dense<0.000000e+00> : vector<8xf32>
    %9 = vector.multi_reduction <add>, %8, %cst_2 [1] : vector<8x16xf32> to vector<8xf32>
    %10 = vector.shape_cast %9 : vector<8xf32> to vector<8x1xf32>
    %11 = tpu.reciprocal %7 : vector<8x1xf32> -> vector<8x1xf32>
    %12 = arith.mulf %10, %11 : vector<8x1xf32>
    %13 = math.log %7 : vector<8x1xf32>
    %14 = arith.subf %12, %13 : vector<8x1xf32>
    %c0_3 = arith.constant 0 : index
    %c0_4 = arith.constant 0 : index
    %15 = vector.load %arg2[%c0_3, %c0_4] : memref<8x1xf32, #tpu.memory_space<vmem>>, vector<8x1xf32>
    tpu.vector_store %arg2[%c0_3, %c0_4], %14 {strides = array<i32>} : memref<8x1xf32, #tpu.memory_space<vmem>>, vector<8x1xf32>,
    return
  }
  func.func @transform_0(%arg0: i32) -> (i32, i32) {
    %c0_i32 = arith.constant 0 : i32
    %c0_i32_0 = arith.constant 0 : i32
    return %arg0, %c0_i32 : i32, i32
  }
  func.func @transform_1(%arg0: i32) -> (i32, i32) {
    %c0_i32 = arith.constant 0 : i32
    %c0_i32_0 = arith.constant 0 : i32
    return %arg0, %c0_i32 : i32, i32
  }
}

</mosaic_0001>

<llo_original>
// kernel: tpu_custom_call.1
$region0: #{tpu_custom_call.1}
  #allocation0 [shape = 'u32[]', space=smem, size = 0x4, offset = 0x4, fixed_abs, tag = 'smem constant byte address 0x4 - core index']
  #allocation1 [shape = 'u32[144,128]{1,0:T(1,128)}', space=vmem, size = 0x12000, scoped, tag = 'internal scratch']
  %s0 = inlined_call_operand.hbm [shape: f32[8,16], index: 0, kind: input, shape index: {}]
  %s1 = inlined_call_operand.vmem [shape: f32[8,1], index: 1, kind: output, shape index: {}]
  %s2 = sld [smem:[#allocation0]]
  $region18: #{tpu_custom_call.1} parent=0
    _
  %s4 = ssub.s32 1, %s2
  %s5 = scalar_select 0, %s4, %s2
  $region1: #{tpu_custom_call.1} parent=0
    #allocation2 [shape = 'u8[4096]{0}', space=vmem, size = 0x1000, scoped, tag = 'input window, operand 0, single buffered']
    #allocation3 [shape = 's32[1]{0}', space=sflag, size = 0x4, scoped, tag = 'scoped memory for tpu_custom_call.1']
    %6 = vsyncpa [#allocation3], 0
    // Predicated region
    $region2: #{tpu_custom_call.1} parent=1 // pred_check
      _
    $region3: #{tpu_custom_call.1} parent=1 // pred_check_branch
      %8 = sbr.rel (0) target = $region5
    $region4: #{tpu_custom_call.1} parent=1 // pred_region
      %s10 = ssub.s32 128, 128
      %11 = vsyncadd [#allocation3], %s10
      %s13 = sshll.u32 [#allocation2], 4
      %s14 = int_to_ptr.vmem [resolvable:$true] %s13
      %16 = dma.hbm_to_vmem [thread:$0]  %s0, 128, %s14, [#allocation3]
    $region5: #{tpu_custom_call.1} parent=1 // pred_fallthru
      _
    // Predicated region
    $region6: #{tpu_custom_call.1} parent=1 // pred_check
      _
    $region7: #{tpu_custom_call.1} parent=1 // pred_check_branch
      %18 = sbr.rel (0) target = $region9
    $region8: #{tpu_custom_call.1} parent=1 // pred_region
      %19 = dma.done [#allocation3], 128
    $region9: #{tpu_custom_call.1} parent=1 // pred_fallthru
      _
    %v20 = vld [vmem:[#allocation2] sm:$0xff]
    %vm21 = vcmask 130048
    %v22 = vsel %vm21, %v20, -inf
    %23 = vmax.xlane.f32.xlu0 %v22
    %v24 = vpop.xlane.xlu0 %23
    %v25 = vsub.f32 %v20, %v24
    %v26 = vmul.f32 %v25, 1.442695
    %v27 = vpow.pop %v26
    %v28 = vsel %vm21, %v27, 0.0
    %29 = vadd.xlane.f32.xlu0 %v28
    %v30 = vpop.xlane.xlu0 %29
    %v31 = vmul.f32 %v27, %v25
    %v32 = vsel %vm21, %v31, 0.0
    %33 = vadd.xlane.f32.xlu0 %v32
    %v34 = vpop.xlane.xlu0 %33
    %v35 = vrcp.pop %v30
    %v36 = vmul.f32 %v34, %v35
    %v37 = vlog2.pop %v30
    %v38 = vmul.f32 %v37, 0.6931472
    %v39 = vsub.f32 %v36, %v38
    %vm40 = vcmask 7168
    %41 = vst.msk [vmem:[%s1] sm:$0xff] %vm40, %v39
    // Predicated region
    $region10: #{tpu_custom_call.1} parent=1 // pred_check
      _
    $region11: #{tpu_custom_call.1} parent=1 // pred_check_branch
      %43 = sbr.rel (0) target = $region13
    $region12: #{tpu_custom_call.1} parent=1 // pred_region
      _
    $region13: #{tpu_custom_call.1} parent=1 // pred_fallthru
      _
    // Predicated region
    $region14: #{tpu_custom_call.1} parent=1 // pred_check
      _
    $region15: #{tpu_custom_call.1} parent=1 // pred_check_branch
      %45 = sbr.rel (0) target = $region17
    $region16: #{tpu_custom_call.1} parent=1 // pred_region
      _
    $region17: #{tpu_custom_call.1} parent=1 // pred_fallthru
      _
    %46 = vsyncpa [#allocation3], 1

</llo_original>
